<compile_context>
chip_gen: v7x
topology: tpu7x:2x2x1
jax: 0.10.0
libtpu: 0.0.40
codegen_flags: <defaults>
</compile_context>

<pallas_src>
import jax
import jax.numpy as jnp
from jax.experimental import pallas as pl
from jax.experimental.pallas import tpu as pltpu

# Normalized binomial filter [1, 4, 6, 4, 1] / 16 (the module's registered buffer).
_W_OUTER = 1.0 / 16.0    # taps 0 and 4
_W_INNER = 4.0 / 16.0    # taps 1 and 3
_W_CENTER = 6.0 / 16.0   # tap 2


def _round_up(a, b):
    return (a + b - 1) // b * b


def _cdiv(a, b):
    return -(-a // b)


def _vmem_capacity_bytes():
    """Physical VMEM of the attached TPU; conservative fallback if unknown."""
    try:
        cap = int(pltpu.get_tpu_info().vmem_capacity_bytes)
        if cap > 0:
            return cap
    except Exception:
        pass
    return 64 * 1024 * 1024   # v7x-sized: a safe lower bound for any generation


def _blurpool_kernel(eo_ref, out_ref):
    """Stride-2 depthwise 5-tap blur via even/odd phases.

    eo_ref:  (TR, 2*W)  packed [even | odd] phase samples, W = Lout + 2
    out_ref: (TR, Lout) exact-width output tile
    """
    lout = out_ref.shape[-1]
    w = eo_ref.shape[-1] // 2
    f32 = jnp.float32
    # Ref-sliced taps: contiguous lane slices, no load-then-slice temporaries.
    e0 = eo_ref[:, 0:lout].astype(f32)
    e1 = eo_ref[:, 1:lout + 1].astype(f32)
    e2 = eo_ref[:, 2:lout + 2].astype(f32)
    o0 = eo_ref[:, w:w + lout].astype(f32)
    o1 = eo_ref[:, w + 1:w + 1 + lout].astype(f32)
    # Filter symmetry: 7 VALU ops instead of 9; f32 accumulation.
    acc = _W_OUTER * (e0 + e2) + _W_INNER * (o0 + o1) + _W_CENTER * e1
    out_ref[...] = acc.astype(out_ref.dtype)


def blurpool(x, pad_type='reflect', filt_size=5, stride=2, pad_off=0):
    """x: (N, C, L) float array. Returns (N, C, Lout), Lout = (L + 2*pad - 5)//2 + 1."""
    if filt_size != 5:
        raise NotImplementedError
    assert stride == 2, "even/odd phase decomposition assumes stride == 2"
    N, C, L = x.shape

    pad_l = (filt_size - 1) // 2 + pad_off            # = 2 + pad_off
    pad_r = -(-(filt_size - 1) // 2) + pad_off        # = 2 + pad_off
    mode = {'reflect': 'reflect', 'refl': 'reflect',
            'repl': 'edge', 'replace': 'edge', 'zero': 'constant'}[pad_type]
    if mode == 'reflect' and L <= max(pad_l, pad_r):
        raise ValueError(f"reflect padding of {max(pad_l, pad_r)} requires L > {max(pad_l, pad_r)}")
    xp = jnp.pad(x, ((0, 0), (0, 0), (pad_l, pad_r)), mode=mode)

    Lp = L + pad_l + pad_r
    Lout = (Lp - filt_size) // stride + 1
    R = N * C
    W = Lout + 2             # even-phase width; equals ceil(Lp/2) for filt=5, stride=2

    # Even/odd phase split, packed lane-tight into one operand [e | o] of width 2W.
    # (Pad + split + concat fuse into the single upstream producer of `eo`.)
    xf = xp.reshape(R, Lp)
    e = xf[:, 0::2]
    o = xf[:, 1::2]
    assert e.shape[1] == W
    if o.shape[1] < W:
        o = jnp.pad(o, ((0, 0), (0, W - o.shape[1])))
    eo = jnp.concatenate([e, o[:, :W]], axis=1)       # (R, 2W)

    # Row-tile size derived from the real VMEM capacity (v5e/v6e 128 MiB, v7x 64 MiB).
    itemsize = jnp.dtype(x.dtype).itemsize
    sublane = max(8, 32 // itemsize)                  # (8,128) f32 / (16,128) bf16 tiles
    vmem_cap = _vmem_capacity_bytes()
    vmem_limit = min(vmem_cap * 3 // 4, 96 * 1024 * 1024)
    budget = vmem_cap // 5                            # per-step working-set target
    # Input + output blocks, double-buffered, plus ~6 f32 tap/accumulator temporaries.
    per_row = (2 * W + Lout) * itemsize * 2 + 6 * Lout * 4
    if per_row * sublane > budget:
        # TODO(synk): lane-tiled grid with 5-tap halo handling for extremely long sequences.
        raise NotImplementedError(
            f"sequence too long for a single row-stripe in VMEM ({per_row * sublane} B/step)")
    tr = max(sublane, min(4096, (budget // per_row) // sublane * sublane))
    tr = min(tr, _round_up(R, sublane))
    ntiles = _cdiv(R, tr)
    if ntiles == 1 and R > sublane:
        ntiles = 2                                    # v7x: give both TensorCores work
    tr = _round_up(_cdiv(R, ntiles), sublane)         # rebalance: minimal boundary padding
    ntiles = _cdiv(R, tr)

    out = pl.pallas_call(
        _blurpool_kernel,
        out_shape=jax.ShapeDtypeStruct((R, Lout), x.dtype),
        grid=(ntiles,),
        in_specs=[pl.BlockSpec((tr, 2 * W), lambda i: (i, 0))],
        out_specs=pl.BlockSpec((tr, Lout), lambda i: (i, 0)),
        compiler_params=pltpu.CompilerParams(
            dimension_semantics=("parallel",),        # shard row tiles across v7x's 2 TCs
            vmem_limit_bytes=vmem_limit,
        ),
    )(eo)

    return out.reshape(N, C, Lout)


def _reference(x):
    """Pure-JAX reference: reflection pad + depthwise stride-2 conv1d (f32)."""
    x = x.astype(jnp.float32)
    N, C, L = x.shape
    xp = jnp.pad(x, ((0, 0), (0, 0), (2, 2)), mode='reflect')
    filt = jnp.array([1.0, 4.0, 6.0, 4.0, 1.0], jnp.float32) / 16.0
    w = jnp.tile(filt.reshape(1, 1, 5), (C, 1, 1))
    return jax.lax.conv_general_dilated(
        xp, w, window_strides=(2,), padding='VALID',
        dimension_numbers=('NCH', 'OIH', 'NCH'), feature_group_count=C)


if __name__ == "__main__":
    key = jax.random.PRNGKey(0)

    # (N, C, L) = (2, 4, 16) -> (2, 4, 8): single-tile path, small shape from the module.
    x1 = jax.random.normal(key, (2, 4, 16), dtype=jnp.float32)
    y1 = jax.block_until_ready(blurpool(x1))
    r1 = _reference(x1)
    assert y1.shape == r1.shape == (2, 4, 8)
    assert jnp.allclose(y1, r1, atol=1e-5, rtol=1e-5)

    # Multi-tile grid, odd length, rows not divisible by the tile (masked boundary block).
    x2 = jax.random.normal(jax.random.PRNGKey(0), (3, 170, 37), dtype=jnp.float32)
    y2 = jax.block_until_ready(blurpool(x2))
    r2 = _reference(x2)
    assert y2.shape == r2.shape
    assert jnp.allclose(y2, r2, atol=1e-5, rtol=1e-5)

    # bf16 input: f32 in-kernel accumulation, bf16 store.
    x3 = jax.random.normal(jax.random.PRNGKey(0), (2, 8, 16), dtype=jnp.bfloat16)
    y3 = jax.block_until_ready(blurpool(x3))
    r3 = _reference(x3)
    assert y3.shape == r3.shape
    assert jnp.allclose(y3.astype(jnp.float32), r3, atol=2e-2, rtol=2e-2)

    print("KERNEL_OK")
</pallas_src>

<mosaic_0001>
module attributes {stable_mosaic.version = 11 : i64} {
  func.func @_blurpool_kernel(%arg0: i32, %arg1: memref<8x20xf32, #tpu.memory_space<vmem>>, %arg2: memref<8x8xf32, #tpu.memory_space<vmem>>) attributes {dimension_semantics = [#tpu.dimension_semantics<parallel>], iteration_bounds = array<i64: 1>, scalar_prefetch = 0 : i64, scratch_operands = 0 : i64, tpu.core_type = #tpu.core_type<tc>, window_params = [{transform_indices = @transform_0, window_bounds = array<i64: 8, 20>}, {transform_indices = @transform_1, window_bounds = array<i64: 8, 8>}]} {
    %c0 = arith.constant 0 : index
    %c0_0 = arith.constant 0 : index
    %0 = vector.load %arg1[%c0, %c0_0] : memref<8x20xf32, #tpu.memory_space<vmem>>, vector<8x8xf32>
    %c0_1 = arith.constant 0 : index
    %c1 = arith.constant 1 : index
    %1 = vector.load %arg1[%c0_1, %c1] : memref<8x20xf32, #tpu.memory_space<vmem>>, vector<8x8xf32>
    %c0_2 = arith.constant 0 : index
    %c2 = arith.constant 2 : index
    %2 = vector.load %arg1[%c0_2, %c2] : memref<8x20xf32, #tpu.memory_space<vmem>>, vector<8x8xf32>
    %c0_3 = arith.constant 0 : index
    %c10 = arith.constant 10 : index
    %3 = vector.load %arg1[%c0_3, %c10] : memref<8x20xf32, #tpu.memory_space<vmem>>, vector<8x8xf32>
    %c0_4 = arith.constant 0 : index
    %c11 = arith.constant 11 : index
    %4 = vector.load %arg1[%c0_4, %c11] : memref<8x20xf32, #tpu.memory_space<vmem>>, vector<8x8xf32>
    %5 = arith.addf %0, %2 : vector<8x8xf32>
    %cst = arith.constant 6.250000e-02 : f32
    %6 = vector.broadcast %cst : f32 to vector<8x8xf32>
    %7 = arith.mulf %6, %5 : vector<8x8xf32>
    %8 = arith.addf %3, %4 : vector<8x8xf32>
    %cst_5 = arith.constant 2.500000e-01 : f32
    %9 = vector.broadcast %cst_5 : f32 to vector<8x8xf32>
    %10 = arith.mulf %9, %8 : vector<8x8xf32>
    %11 = arith.addf %7, %10 : vector<8x8xf32>
    %cst_6 = arith.constant 3.750000e-01 : f32
    %12 = vector.broadcast %cst_6 : f32 to vector<8x8xf32>
    %13 = arith.mulf %12, %1 : vector<8x8xf32>
    %14 = arith.addf %11, %13 : vector<8x8xf32>
    %c0_7 = arith.constant 0 : index
    %c0_8 = arith.constant 0 : index
    %15 = vector.load %arg2[%c0_7, %c0_8] : memref<8x8xf32, #tpu.memory_space<vmem>>, vector<8x8xf32>
    tpu.vector_store %arg2[%c0_7, %c0_8], %14 {strides = array<i32>} : memref<8x8xf32, #tpu.memory_space<vmem>>, vector<8x8xf32>,
    return
  }
  func.func @transform_0(%arg0: i32) -> (i32, i32) {
    %c0_i32 = arith.constant 0 : i32
    %c0_i32_0 = arith.constant 0 : i32
    return %arg0, %c0_i32 : i32, i32
  }
  func.func @transform_1(%arg0: i32) -> (i32, i32) {
    %c0_i32 = arith.constant 0 : i32
    %c0_i32_0 = arith.constant 0 : i32
    return %arg0, %c0_i32 : i32, i32
  }
}

</mosaic_0001>

<llo_original>
// kernel: tpu_custom_call.1
$region0: #{tpu_custom_call.1}
  #allocation0 [shape = 'u32[]', space=smem, size = 0x4, offset = 0x4, fixed_abs, tag = 'smem constant byte address 0x4 - core index']
  #allocation1 [shape = 'u32[144,128]{1,0:T(1,128)}', space=vmem, size = 0x12000, scoped, tag = 'internal scratch']
  %s0 = inlined_call_operand.hbm [shape: f32[8,20], index: 0, kind: input, shape index: {}]
  %s1 = inlined_call_operand.hbm [shape: f32[8,8], index: 1, kind: output, shape index: {}]
  %s2 = sld [smem:[#allocation0]]
  $region18: #{tpu_custom_call.1} parent=0
    _
  %s4 = ssub.s32 1, %s2
  %s5 = scalar_select 0, %s4, %s2
  $region1: #{tpu_custom_call.1} parent=0
    #allocation2 [shape = 'u8[4096]{0}', space=vmem, size = 0x1000, scoped, tag = 'input window, operand 0, single buffered']
    #allocation3 [shape = 's32[1]{0}', space=sflag, size = 0x4, scoped, tag = 'scoped memory for tpu_custom_call.1']
    #allocation4 [shape = 's32[1]{0}', space=sflag, size = 0x4, scoped, tag = 'scoped memory for tpu_custom_call.1']
    #allocation5 [shape = 'u8[4096]{0}', space=vmem, size = 0x1000, scoped, tag = 'output window, operand 0, single buffered']
    %6 = vsyncpa [#allocation3], 0
    %7 = vsyncpa [#allocation4], 0
    // Predicated region
    $region2: #{tpu_custom_call.1} parent=1 // pred_check
      _
    $region3: #{tpu_custom_call.1} parent=1 // pred_check_branch
      %9 = sbr.rel (0) target = $region5
    $region4: #{tpu_custom_call.1} parent=1 // pred_region
      %s11 = ssub.s32 128, 128
      %12 = vsyncadd [#allocation3], %s11
      %s14 = sshll.u32 [#allocation2], 4
      %s15 = int_to_ptr.vmem [resolvable:$true] %s14
      %17 = dma.hbm_to_vmem [thread:$0]  %s0, 128, %s15, [#allocation3]
    $region5: #{tpu_custom_call.1} parent=1 // pred_fallthru
      _
    // Predicated region
    $region6: #{tpu_custom_call.1} parent=1 // pred_check
      _
    $region7: #{tpu_custom_call.1} parent=1 // pred_check_branch
      %19 = sbr.rel (0) target = $region9
    $region8: #{tpu_custom_call.1} parent=1 // pred_region
      %20 = dma.done [#allocation3], 128
    $region9: #{tpu_custom_call.1} parent=1 // pred_fallthru
      _
    %v21 = vld [vmem:[#allocation2] sm:$0xff]
    %23 = vrot.lane.b32.xlu0 %v21, 126
    %v24 = vpop.permute.xlu0 %23
    %v26 = vadd.f32 %v21, %v24
    %v27 = vmul.f32 %v26, 0.0625
    %28 = vrot.lane.b32.xlu0 %v21, 127
    %v29 = vpop.permute.xlu0 %28
    %v31 = vadd.f32 %v21, %v29
    %v32 = vmul.f32 %v31, 0.25
    %34 = vrot.lane.b32.xlu0 %v32, 118
    %v35 = vpop.permute.xlu0 %34
    %v37 = vadd.f32 %v27, %v35
    %v38 = vmul.f32 %v21, 0.375
    %40 = vrot.lane.b32.xlu0 %v38, 127
    %v41 = vpop.permute.xlu0 %40
    %v43 = vadd.f32 %v37, %v41
    %vm44 = vcmask 64512
    %45 = vst.msk [vmem:[#allocation5] sm:$0xff] %vm44, %v43
    // Predicated region
    $region10: #{tpu_custom_call.1} parent=1 // pred_check
      _
    $region11: #{tpu_custom_call.1} parent=1 // pred_check_branch
      %47 = sbr.rel (0) target = $region13
    $region12: #{tpu_custom_call.1} parent=1 // pred_region
      %s49 = ssub.s32 128, 128
      %50 = vsyncadd [#allocation4], %s49
      %s52 = sshll.u32 [#allocation5], 4
      %s53 = int_to_ptr.vmem [resolvable:$true] %s52
      %55 = dma.vmem_to_hbm [thread:$0]  %s53, 128, %s1, [#allocation4]
    $region13: #{tpu_custom_call.1} parent=1 // pred_fallthru
      _
    // Predicated region
    $region14: #{tpu_custom_call.1} parent=1 // pred_check
      _
    $region15: #{tpu_custom_call.1} parent=1 // pred_check_branch
      %57 = sbr.rel (0) target = $region17
    $region16: #{tpu_custom_call.1} parent=1 // pred_region
      %58 = dma.done [#allocation4], 128
    $region17: #{tpu_custom_call.1} parent=1 // pred_fallthru
      _
    %59 = vsyncpa [#allocation3], 1
    %60 = vsyncpa [#allocation4], 1

</llo_original>
